<compile_context>
chip_gen: v6e
topology: v6e:2x2x1
jax: 0.10.0
libtpu: 0.0.40
codegen_flags: <defaults>
</compile_context>

<pallas_src>
import functools

import jax
import jax.numpy as jnp
from jax.experimental import pallas as pl
from jax.experimental.pallas import tpu as pltpu


def _round_up(x, m):
    return ((x + m - 1) // m) * m


def _pick_tile(npad, cap):
    """Largest multiple of 128 that divides npad and is <= cap (npad % 128 == 0)."""
    best = 128
    t = 128
    lim = min(max(cap, 128), npad)
    while t <= lim:
        if npad % t == 0:
            best = t
        t += 128
    return best


def _device_flags():
    kind = ""
    try:
        kind = jax.devices()[0].device_kind.lower()
    except Exception:
        pass
    is_v5 = "v5" in kind
    is_v7 = "v7" in kind
    return is_v5, is_v7


# ---------------------------------------------------------------------------
# GATConv — projection kernel: z = h @ W   (bf16 MXU, bf16 out)
# ---------------------------------------------------------------------------
def proj_kernel(h_ref, w_ref, z_ref):
    z_ref[...] = jnp.dot(h_ref[...], w_ref[...],
                         preferred_element_type=jnp.float32).astype(z_ref.dtype)


# ---------------------------------------------------------------------------
# GATConv — attention kernel: single-pass masked softmax over the full source
# row + per-head aggregation.  Scores are derived in-kernel from z (no HBM
# score arrays, no transposes).
# ---------------------------------------------------------------------------
def attn_kernel(zdst_ref, zsrc_ref, adj_ref, a_r_ref, a_lt_ref, bias_ref, out_ref,
                *, num_heads, out_size, score_dtype):
    H, O = num_heads, out_size
    zdst = zdst_ref[...]                                           # (TM, H*O) bf16
    zsrc = zsrc_ref[...]                                           # (N,  H*O) bf16

    # er[v,h] = <z_dst[v, h*O:(h+1)*O], attn_r[h]>   (TM, H)
    er = jnp.dot(zdst, a_r_ref[...].astype(jnp.bfloat16),
                 preferred_element_type=jnp.float32).astype(score_dtype)
    # el_t[h,u] = <z_src[u, h*O:(h+1)*O], attn_l[h]> (H, N) — lane-dense row per head,
    # produced by an NT dot_general (contract last dims), so no relayout needed.
    el_t = jax.lax.dot_general(
        a_lt_ref[...].astype(jnp.bfloat16), zsrc,
        (((1,), (1,)), ((), ())),
        preferred_element_type=jnp.float32).astype(score_dtype)

    # adj holds exact 0/1 (int8): it is both the mask and its arithmetic form.
    mask = adj_ref[...].astype(score_dtype)                        # (TM, N)

    head_outs = []
    for hd in range(H):
        e = er[:, hd:hd + 1] + el_t[hd:hd + 1, :]                  # (TM, N) e[v,u]=er[v]+el[u]
        e = jnp.maximum(e, 0.2 * e)                                # DGL GATConv leaky_relu(0.2)
        m = jnp.max(e, axis=-1, keepdims=True)                     # unmasked row max (exp<=1)
        p = jnp.exp(e - m) * mask                                  # mask after exp
        l = jnp.sum(p, axis=-1, keepdims=True, dtype=jnp.float32)  # (TM, 1) f32 denom
        inv = pl.reciprocal(jnp.where(l > 0.0, l, 1.0), approx=True)
        acc = jnp.dot(p.astype(jnp.bfloat16), zsrc[:, hd * O:(hd + 1) * O],
                      preferred_element_type=jnp.float32)          # (TM, O) f32
        head_outs.append(acc * inv)

    res = jnp.concatenate(head_outs, axis=-1) + bias_ref[...]      # (TM, H*O) + bias
    res = jnp.maximum(res, 0.01 * res)                             # activation=F.leaky_relu
    out_ref[...] = res.astype(out_ref.dtype)                       # single lane-dense store


def gat_conv_fused(h_stack, w_stack, a_r_stack, a_lt_stack, bias_stack, adj_stack,
                   *, num_heads, out_size, score_dtype, vmem_limit, tm_cap=512):
    P, Npad, F = h_stack.shape
    HO = num_heads * out_size
    H = num_heads

    # --- 1) projection -------------------------------------------------------
    TMp = _pick_tile(Npad, 1024)
    z = pl.pallas_call(
        proj_kernel,
        out_shape=jax.ShapeDtypeStruct((P, Npad, HO), jnp.bfloat16),
        grid_spec=pltpu.PrefetchScalarGridSpec(
            num_scalar_prefetch=0,
            grid=(P, Npad // TMp),
            in_specs=[pl.BlockSpec((None, TMp, F), lambda p, i: (p, i, 0)),
                      pl.BlockSpec((None, F, HO), lambda p, i: (p, 0, 0))],
            out_specs=pl.BlockSpec((None, TMp, HO), lambda p, i: (p, i, 0))),
        compiler_params=pltpu.CompilerParams(
            dimension_semantics=("parallel", "parallel"),
            vmem_limit_bytes=vmem_limit),
    )(h_stack, w_stack)

    # --- 2) attention + aggregation (full source row, no reduction axis) -----
    sd_bytes = jnp.dtype(score_dtype).itemsize
    budget = int(vmem_limit * 0.7)
    fixed = 2 * Npad * HO * 2                       # double-buffered bf16 z_src row
    per_row = Npad * (2 * 1 + 3 * sd_bytes)         # adj (x2 buffers) + score-chain temps
    cap = max(128, min(tm_cap, (budget - fixed) // max(per_row, 1)))
    TM = _pick_tile(Npad, cap)

    kernel = functools.partial(attn_kernel, num_heads=num_heads, out_size=out_size,
                               score_dtype=score_dtype)
    out = pl.pallas_call(
        kernel,
        out_shape=jax.ShapeDtypeStruct((P, Npad, HO), jnp.bfloat16),
        grid_spec=pltpu.PrefetchScalarGridSpec(
            num_scalar_prefetch=0,
            grid=(P, Npad // TM),
            in_specs=[pl.BlockSpec((None, TM, HO), lambda p, i: (p, i, 0)),     # z (dest tile)
                      pl.BlockSpec((None, Npad, HO), lambda p, i: (p, 0, 0)),   # z (full src row)
                      pl.BlockSpec((None, TM, Npad), lambda p, i: (p, i, 0)),   # adj tile (int8)
                      pl.BlockSpec((None, HO, H), lambda p, i: (p, 0, 0)),      # attn_r block-diag
                      pl.BlockSpec((None, H, HO), lambda p, i: (p, 0, 0)),      # attn_l^T block-diag
                      pl.BlockSpec((None, 1, HO), lambda p, i: (p, 0, 0))],     # bias
            out_specs=pl.BlockSpec((None, TM, HO), lambda p, i: (p, i, 0))),
        compiler_params=pltpu.CompilerParams(
            dimension_semantics=("parallel", "parallel"),
            vmem_limit_bytes=vmem_limit),
    )(z, z, adj_stack, a_r_stack, a_lt_stack, bias_stack)
    return out


# ---------------------------------------------------------------------------
# SemanticAttention — (a) node-tiled score reduction, (b) node-tiled combine.
# Metapath pairs are selected inside the BlockSpec index_map via a
# scalar-prefetched (npairs, 2) table (no zstack copy in HBM).
# ---------------------------------------------------------------------------
def sem_score_kernel(pair_idx_ref, nvalid_ref, z0_ref, z1_ref, w1_ref, b1_ref, w2_ref,
                     s_ref, acc_ref, *, tnode):
    p = pl.program_id(0)
    t = pl.program_id(1)
    nt = pl.num_programs(1)

    @pl.when(t == 0)
    def _():
        acc_ref[...] = jnp.zeros_like(acc_ref)

    n_i = nvalid_ref[p]
    rows = jax.lax.broadcasted_iota(jnp.int32, (tnode, 1), 0) + t * tnode
    mask = (rows < n_i).astype(jnp.float32)                        # (TN, 1) pad-node mask

    w1 = w1_ref[...].astype(jnp.bfloat16)                          # (D, Hd)
    b1 = b1_ref[...]                                               # (1, Hd) f32
    w2 = w2_ref[...]                                               # (1, Hd) f32

    def branch_sum(z_ref):
        hid = jnp.tanh(jnp.dot(z_ref[...].astype(jnp.bfloat16), w1,
                               preferred_element_type=jnp.float32) + b1)   # (TN, Hd)
        sc = jnp.sum(hid * w2, axis=-1, keepdims=True)             # (TN, 1) VPU mul + lane reduce
        return jnp.sum(sc * mask, keepdims=True)                   # (1, 1)

    acc_ref[...] += jnp.concatenate([branch_sum(z0_ref), branch_sum(z1_ref)], axis=-1)

    @pl.when(t == nt - 1)
    def _():
        s_ref[...] = acc_ref[...] / n_i.astype(jnp.float32)        # .mean(0) over real nodes


def sem_combine_kernel(pair_idx_ref, beta_ref, z0_ref, z1_ref, out_ref):
    b = beta_ref[...]                                              # (1, 2) f32
    z0 = z0_ref[...].astype(jnp.float32)
    z1 = z1_ref[...].astype(jnp.float32)
    out_ref[...] = b[:, 0:1] * z0 + b[:, 1:2] * z1


def semantic_attention(gat_out, pair_idx, nvalid, w1, b1, w2, *, vmem_limit, tnode_cap=2048):
    P, Npad, D = gat_out.shape
    npairs = pair_idx.shape[0]
    Hd = w1.shape[1]
    TN = _pick_tile(Npad, tnode_cap)
    nt = Npad // TN

    score_kernel = functools.partial(sem_score_kernel, tnode=TN)
    scores = pl.pallas_call(
        score_kernel,
        out_shape=jax.ShapeDtypeStruct((npairs, 1, 2), jnp.float32),
        grid_spec=pltpu.PrefetchScalarGridSpec(
            num_scalar_prefetch=2,
            grid=(npairs, nt),
            in_specs=[pl.BlockSpec((None, TN, D), lambda p, t, pidx, nv: (pidx[p, 0], t, 0)),
                      pl.BlockSpec((None, TN, D), lambda p, t, pidx, nv: (pidx[p, 1], t, 0)),
                      pl.BlockSpec((D, Hd), lambda p, t, pidx, nv: (0, 0)),
                      pl.BlockSpec((1, Hd), lambda p, t, pidx, nv: (0, 0)),
                      pl.BlockSpec((1, Hd), lambda p, t, pidx, nv: (0, 0))],
            out_specs=pl.BlockSpec((None, 1, 2), lambda p, t, pidx, nv: (p, 0, 0)),
            scratch_shapes=[pltpu.VMEM((1, 2), jnp.float32)]),
        compiler_params=pltpu.CompilerParams(
            dimension_semantics=("parallel", "arbitrary"),
            vmem_limit_bytes=vmem_limit),
    )(pair_idx, nvalid, gat_out, gat_out, w1, b1, w2)

    # softmax over the 2 metapaths per pair — 4 scalars, exact, done in plain JAX.
    beta = jax.nn.softmax(scores.reshape(npairs, 2), axis=-1).reshape(npairs, 1, 2)

    out = pl.pallas_call(
        sem_combine_kernel,
        out_shape=jax.ShapeDtypeStruct((npairs, Npad, D), jnp.float32),
        grid_spec=pltpu.PrefetchScalarGridSpec(
            num_scalar_prefetch=1,
            grid=(npairs, nt),
            in_specs=[pl.BlockSpec((None, 1, 2), lambda p, t, pidx: (p, 0, 0)),
                      pl.BlockSpec((None, TN, D), lambda p, t, pidx: (pidx[p, 0], t, 0)),
                      pl.BlockSpec((None, TN, D), lambda p, t, pidx: (pidx[p, 1], t, 0))],
            out_specs=pl.BlockSpec((None, TN, D), lambda p, t, pidx: (p, t, 0))),
        compiler_params=pltpu.CompilerParams(
            dimension_semantics=("parallel", "parallel"),
            vmem_limit_bytes=vmem_limit),
    )(pair_idx, beta, gat_out, gat_out)
    return out


# ---------------------------------------------------------------------------
# HANLayer forward (glue)
# ---------------------------------------------------------------------------
def build_attn_r_mat(attn_r):
    """(H*O, H) block-diag so that z_dst @ a_r gives er per head."""
    H, O = attn_r.shape
    eye = jnp.eye(H, dtype=attn_r.dtype)
    return (attn_r[:, :, None] * eye[:, None, :]).reshape(H * O, H)


def build_attn_l_t_mat(attn_l):
    """(H, H*O) block-diag rows so that a_l_t · z_src^T (NT dot) gives el per head."""
    H, O = attn_l.shape
    eye = jnp.eye(H, dtype=attn_l.dtype)
    return (eye[:, :, None] * attn_l[None, :, :]).reshape(H, H * O)


def han_layer_forward(gs, hs, gat_params, sem_params, *, num_heads, out_size):
    ns = [int(h.shape[0]) for h in hs]
    assert ns[1] == ns[2] and ns[0] == ns[3], "metapath pairs must share node sets"
    HO = num_heads * out_size
    Npad = _round_up(max(ns), 128)

    is_v5, is_v7 = _device_flags()
    # v5* has no bf16 VPU/EUP -> keep the (TM, N) score/exp chain in f32 there.
    score_dtype = jnp.float32 if is_v5 else jnp.bfloat16
    # v7x: 64 MiB physical VMEM (half of v5e/v6e) -> smaller scoped budget.
    vmem_limit = (48 if is_v7 else 96) * 1024 * 1024

    # Pad every graph to a common node count so all 4 GATConvs run in one call.
    h_stack = jnp.stack([
        jnp.pad(h.astype(jnp.float32), ((0, Npad - h.shape[0]), (0, 0))) for h in hs
    ]).astype(jnp.bfloat16)
    adj_stack = jnp.stack([
        jnp.pad((adj != 0).astype(jnp.int8),
                ((0, Npad - adj.shape[0]), (0, Npad - adj.shape[1]))) for adj in gs])
    w_stack = jnp.stack([w for (w, al, ar, b) in gat_params]).astype(jnp.bfloat16)
    a_r_stack = jnp.stack([build_attn_r_mat(ar) for (w, al, ar, b) in gat_params])
    a_lt_stack = jnp.stack([build_attn_l_t_mat(al) for (w, al, ar, b) in gat_params])
    bias_stack = jnp.stack([b.reshape(1, HO) for (w, al, ar, b) in gat_params])

    gat_out = gat_conv_fused(h_stack, w_stack, a_r_stack, a_lt_stack, bias_stack,
                             adj_stack, num_heads=num_heads, out_size=out_size,
                             score_dtype=score_dtype, vmem_limit=vmem_limit)  # (P, Npad, H*O) bf16

    # torch.stack((embs[1], embs[2]), dim=1) -> lnc pair ; (embs[0], embs[3]) -> dis pair.
    # Pair selection is done via the scalar-prefetched index table (no zstack copy).
    w1, b1, w2 = sem_params
    pair_idx = jnp.array([[1, 2], [0, 3]], jnp.int32)
    nvalid = jnp.array([ns[1], ns[0]], jnp.int32)
    sem_out = semantic_attention(gat_out, pair_idx, nvalid, w1, b1, w2,
                                 vmem_limit=vmem_limit)                       # (2, Npad, D) f32

    lnc = sem_out[0, :ns[1], :]
    dis = sem_out[1, :ns[0], :]
    return [(lnc, dis), (lnc, lnc), (dis, lnc), (dis, dis)]


if __name__ == "__main__":
    key = jax.random.PRNGKey(0)

    num_meta_paths = 4
    in_size = 32
    out_size = 16
    heads = 2
    hidden = 128                      # SemanticAttention default hidden_size
    d = out_size * heads
    # metapaths 1, 2 are "lnc" graphs, metapaths 0, 3 are "dis" graphs
    n_lnc = 16
    n_dis = 8
    ns = [n_dis, n_lnc, n_lnc, n_dis]

    keys = iter(jax.random.split(key, 48))

    # GATConv params per metapath: W (F, H*O), attn_l/attn_r (H, O), bias (H*O,)
    gat_params = []
    for _ in range(num_meta_paths):
        w = jax.random.normal(next(keys), (in_size, heads * out_size), jnp.float32) * 0.1
        al = jax.random.normal(next(keys), (heads, out_size), jnp.float32) * 0.1
        ar = jax.random.normal(next(keys), (heads, out_size), jnp.float32) * 0.1
        b = jnp.zeros((heads * out_size,), jnp.float32)   # DGL GATConv bias (init 0)
        gat_params.append((w, al, ar, b))

    # SemanticAttention params (shared across both calls)
    w1 = jax.random.normal(next(keys), (d, hidden), jnp.float32) * 0.1
    b1 = jnp.zeros((1, hidden), jnp.float32)
    w2 = jax.random.normal(next(keys), (1, hidden), jnp.float32) * 0.1

    # Graphs (dense adjacency, adj[v, u] = 1 iff edge u -> v) and node features
    gs, hs = [], []
    for n in ns:
        adj = jax.random.bernoulli(next(keys), 0.4, (n, n)).astype(jnp.float32)
        gs.append(adj)
        hs.append(jax.random.normal(next(keys), (n, in_size), jnp.float32))

    outs = han_layer_forward(
        gs, hs, gat_params, (w1, b1, w2), num_heads=heads, out_size=out_size
    )
    jax.block_until_ready(outs)
    print("KERNEL_OK")
</pallas_src>

<mosaic_0001>
module attributes {stable_mosaic.version = 11 : i64} {
  func.func @proj_kernel(%arg0: i32, %arg1: i32, %arg2: memref<1x128x32xbf16, #tpu.memory_space<vmem>>, %arg3: memref<1x32x32xbf16, #tpu.memory_space<vmem>>, %arg4: memref<1x128x32xbf16, #tpu.memory_space<vmem>>) attributes {dimension_semantics = [#tpu.dimension_semantics<parallel>, #tpu.dimension_semantics<parallel>], iteration_bounds = array<i64: 4, 1>, scalar_prefetch = 0 : i64, scratch_operands = 0 : i64, tpu.core_type = #tpu.core_type<tc>, window_params = [{transform_indices = @transform_0, window_bounds = array<i64: 1, 128, 32>}, {transform_indices = @transform_1, window_bounds = array<i64: 1, 32, 32>}, {transform_indices = @transform_2, window_bounds = array<i64: 1, 128, 32>}]} {
    %c0 = arith.constant 0 : index
    %c0_0 = arith.constant 0 : index
    %c0_1 = arith.constant 0 : index
    %0 = vector.load %arg2[%c0, %c0_0, %c0_1] : memref<1x128x32xbf16, #tpu.memory_space<vmem>>, vector<1x128x32xbf16>
    %1 = vector.shape_cast %0 : vector<1x128x32xbf16> to vector<128x32xbf16>
    %c0_2 = arith.constant 0 : index
    %c0_3 = arith.constant 0 : index
    %c0_4 = arith.constant 0 : index
    %2 = vector.load %arg3[%c0_2, %c0_3, %c0_4] : memref<1x32x32xbf16, #tpu.memory_space<vmem>>, vector<1x32x32xbf16>
    %3 = vector.shape_cast %2 : vector<1x32x32xbf16> to vector<32x32xbf16>
    %cst = arith.constant dense<0.000000e+00> : vector<128x32xf32>
    %4 = tpu.matmul %1, %3, %cst {dimension_numbers = #tpu.dot_dimension_numbers<[1], [0], [0], [1], [0, 0, 1, 1], [], []>} : vector<128x32xbf16>, vector<32x32xbf16>, vector<128x32xf32> -> vector<128x32xf32>
    %5 = arith.truncf %4 : vector<128x32xf32> to vector<128x32xbf16>
    %c0_5 = arith.constant 0 : index
    %c0_6 = arith.constant 0 : index
    %c0_7 = arith.constant 0 : index
    %6 = vector.load %arg4[%c0_5, %c0_6, %c0_7] : memref<1x128x32xbf16, #tpu.memory_space<vmem>>, vector<1x128x32xbf16>
    %7 = vector.shape_cast %6 : vector<1x128x32xbf16> to vector<128x32xbf16>
    %8 = vector.shape_cast %5 : vector<128x32xbf16> to vector<1x128x32xbf16>
    tpu.vector_store %arg4[%c0_5, %c0_6, %c0_7], %8 {strides = array<i32>} : memref<1x128x32xbf16, #tpu.memory_space<vmem>>, vector<1x128x32xbf16>,
    return
  }
  func.func @transform_0(%arg0: i32, %arg1: i32) -> (i32, i32, i32) {
    %c0_i32 = arith.constant 0 : i32
    %c0_i32_0 = arith.constant 0 : i32
    return %arg0, %arg1, %c0_i32 : i32, i32, i32
  }
  func.func @transform_1(%arg0: i32, %arg1: i32) -> (i32, i32, i32) {
    %c0_i32 = arith.constant 0 : i32
    %c0_i32_0 = arith.constant 0 : i32
    %c0_i32_1 = arith.constant 0 : i32
    return %arg0, %c0_i32, %c0_i32_0 : i32, i32, i32
  }
  func.func @transform_2(%arg0: i32, %arg1: i32) -> (i32, i32, i32) {
    %c0_i32 = arith.constant 0 : i32
    %c0_i32_0 = arith.constant 0 : i32
    return %arg0, %arg1, %c0_i32 : i32, i32, i32
  }
}

</mosaic_0001>

<llo_original>
// kernel: tpu_custom_call.1
$region0: #{tpu_custom_call.1}
  #allocation0 [shape = 'u32[]', space=smem, size = 0x4, offset = 0x4, fixed_abs, tag = 'smem constant byte address 0x4 - core index']
  #allocation1 [shape = 'u32[144,128]{1,0:T(1,128)}', space=vmem, size = 0x12000, scoped, tag = 'internal scratch']
  %s0 = inlined_call_operand.vmem [shape: bf16[4,128,32], index: 0, kind: input, shape index: {}]
  %s1 = inlined_call_operand.vmem [shape: bf16[4,32,32], index: 1, kind: input, shape index: {}]
  %s2 = inlined_call_operand.vmem [shape: bf16[4,128,32], index: 2, kind: output, shape index: {}]
  %s3 = sld [smem:[#allocation0]]
  $region41: #{tpu_custom_call.1} parent=0
    _
  %s5 = ssub.s32 1, %s3
  %s6 = scalar_select 0, %s5, %s3
  loop: start=0, step=1, limit=6
  $region2: #{tpu_custom_call.1} parent=0 // loop_pre_header
    _
  $region3: #{tpu_custom_call.1} parent=0 // loop_header
    %s8 = sphi 0, %s12
    %p9 = scmp.ge.s32.totalorder %s8, 6
    %s15 = sphi 0, %s27
    %s16 = sphi 0, %s23
    %s17 = sphi 0, %s15
    %s18 = sphi 0, %s16
    %s19 = sphi 0, %s17
    %s20 = sphi 0, %s18
    %s32 = sphi 0, %s34
    %s35 = sphi 0, %s32
    %s36 = sphi 0, %s35
    %s52 = sphi 0, %s36
    %s58 = sphi 0, %s60
    %s61 = sphi 0, %s58
    %s62 = sphi 0, %s61
    %s78 = sphi 0, %s62
    %s86 = sphi 0, %s88
    %s89 = sphi 0, %s86
    %s90 = sphi 0, %s89
    %s106 = sphi 0, %s90
  $region4: #{tpu_custom_call.1} parent=0 // loop_header_branch
    %11 = sbr.rel (%p9) target = $region8
  $region5: #{tpu_custom_call.1} parent=0 // loop_body
    %s13 = ssub.s32 %s8, 1
    %s14 = ssub.s32 %s8, 2
    %s21 = sadd.s32 1, %s16
    %p22 = scmp.ge.s32.totalorder %s21, 1
    %s23 = scalar_select %p22, 0, %s21
    %s24 = sadd.s32 1, %s15
    %s25 = scalar_select %p22, %s24, %s15
    %p26 = scmp.ge.s32.totalorder %s25, 4
    %s27 = scalar_select %p26, 0, %s25
    %s28 = ssub.s32 %s15, %s27
    %s29 = ssub.s32 %s16, %s23
    %s30 = sor.u32 %s28, %s29
    %p31 = scmp.eq.s32.totalorder %s30, 0
    %s33 = sadd.s32 %s32, 1
    %s34 = scalar_select %p31, %s32, %s33
    %p37 = pneg %p31
    %p38 = scmp.eq.s32.totalorder %s8, 3
    %p39 = por %p37, %p38
    %p40 = scmp.ne.s32.totalorder %s32, %s35
    %p41 = scmp.eq.s32.totalorder %s8, 0
    %p42 = por %p40, %p41
    %p43 = scmp.ne.s32.totalorder %s32, %s35
    %p44 = scmp.eq.s32.totalorder %s13, 3
    %p45 = por %p43, %p44
    %p46 = scmp.ne.s32.totalorder %s35, %s36
    %p47 = scmp.eq.s32.totalorder %s13, 0
    %p48 = por %p46, %p47
    %p49 = scmp.ne.s32.totalorder %s35, %s36
    %p50 = scmp.eq.s32.totalorder %s14, 3
    %p51 = por %p49, %p50
    %p53 = scmp.ne.s32.totalorder %s36, %s52
    %p54 = scmp.eq.s32.totalorder %s14, 0
    %p55 = por %p53, %p54
    %s56 = ssub.s32 %s15, %s27
    %p57 = scmp.eq.s32.totalorder %s56, 0
    %s59 = sadd.s32 %s58, 1
    %s60 = scalar_select %p57, %s58, %s59
    %p63 = pneg %p57
    %p64 = scmp.eq.s32.totalorder %s8, 3
    %p65 = por %p63, %p64
    %p66 = scmp.ne.s32.totalorder %s58, %s61
    %p67 = scmp.eq.s32.totalorder %s8, 0
    %p68 = por %p66, %p67
    %p69 = scmp.ne.s32.totalorder %s58, %s61
    %p70 = scmp.eq.s32.totalorder %s13, 3
    %p71 = por %p69, %p70
    %p72 = scmp.ne.s32.totalorder %s61, %s62
    %p73 = scmp.eq.s32.totalorder %s13, 0
    %p74 = por %p72, %p73
    %p75 = scmp.ne.s32.totalorder %s61, %s62
    %p76 = scmp.eq.s32.totalorder %s14, 3
    %p77 = por %p75, %p76
    %p79 = scmp.ne.s32.totalorder %s62, %s78
    %p80 = scmp.eq.s32.totalorder %s14, 0
    %p81 = por %p79, %p80
    %s82 = ssub.s32 %s15, %s27
    %s83 = ssub.s32 %s16, %s23
    %s84 = sor.u32 %s82, %s83
    %p85 = scmp.eq.s32.totalorder %s84, 0
    %s87 = sadd.s32 %s86, 1
    %s88 = scalar_select %p85, %s86, %s87
    %p91 = pneg %p85
    %p92 = scmp.eq.s32.totalorder %s8, 3
    %p93 = por %p91, %p92
    %p94 = scmp.ne.s32.totalorder %s86, %s89
    %p95 = scmp.eq.s32.totalorder %s8, 0
    %p96 = por %p94, %p95
    %p97 = scmp.ne.s32.totalorder %s86, %s89
    %p98 = scmp.eq.s32.totalorder %s13, 3
    %p99 = por %p97, %p98
    %p100 = scmp.ne.s32.totalorder %s89, %s90
    %p101 = scmp.eq.s32.totalorder %s13, 0
    %p102 = por %p100, %p101
    %p103 = scmp.ne.s32.totalorder %s89, %s90
    %p104 = scmp.eq.s32.totalorder %s14, 3
    %p105 = por %p103, %p104
    %p107 = scmp.ne.s32.totalorder %s90, %s106
    %p108 = scmp.eq.s32.totalorder %s14, 0
    %p109 = por %p107, %p108
    %p110 = scmp.le.s32.totalorder 1, %s8
    %p111 = scmp.lt.s32.totalorder %s8, 5
    %p112 = pnand %p110, %p111
    %p113 = pneg %p112
    // Predicated region
    $region9: #{tpu_custom_call.1} parent=5 // pred_check
      _
    $region10: #{tpu_custom_call.1} parent=5 // pred_check_branch
      %115 = sbr.rel (%p112) target = $region12
    $region11: #{tpu_custom_call.1} parent=5 // pred_region
      %s116 = ssub.s32 %s8, 1
    $region12: #{tpu_custom_call.1} parent=5 // pred_fallthru
      _
    %p117 = scmp.lt.s32.totalorder %s8, 4
    // Predicated region
    $region13: #{tpu_custom_call.1} parent=5 // pred_check
      %p118 = pneg %p117
    $region14: #{tpu_custom_call.1} parent=5 // pred_check_branch
      %120 = sbr.rel (%p118) target = $region16
    $region15: #{tpu_custom_call.1} parent=5 // pred_region
      // Predicated region
      $region17: #{tpu_custom_call.1} parent=15 // pred_check
        %p121 = pneg %p42
      $region18: #{tpu_custom_call.1} parent=15 // pred_check_branch
        %123 = sbr.rel (%p121) target = $region20
      $region19: #{tpu_custom_call.1} parent=15 // pred_region
        %s124 = smul.u32 16, %s16
        %p125 = scmp.lt.s32.totalorder %s15, 3
        %s126 = scalar_select %p125, %s15, 3
        %p127 = scmp.lt.s32.totalorder %s124, 15
        %s128 = scalar_select %p127, %s124, 15
        %s129 = smul.addr %s126, 16
        %s130 = sadd.s32 %s128, %s129
        %s131 = smul.addr %s130, 4
        %s132 = scalar_lea.vmem %s0, %s131
        %s133 = smul.u32 16, %s16
      $region20: #{tpu_custom_call.1} parent=15 // pred_fallthru
        _
      // Predicated region
      $region21: #{tpu_custom_call.1} parent=15 // pred_check
        %p134 = pneg %p68
      $region22: #{tpu_custom_call.1} parent=15 // pred_check_branch
        %136 = sbr.rel (%p134) target = $region24
      $region23: #{tpu_custom_call.1} parent=15 // pred_region
        %p137 = scmp.lt.s32.totalorder %s15, 3
        %s138 = scalar_select %p137, %s15, 3
        %s139 = smul.addr %s138, 4
        %s140 = smul.addr %s139, 4
        %s141 = scalar_lea.vmem %s1, %s140
      $region24: #{tpu_custom_call.1} parent=15 // pred_fallthru
        _
    $region16: #{tpu_custom_call.1} parent=5 // pred_fallthru
      _
    %p142 = scmp.le.s32.totalorder 1, %s8
    %p143 = scmp.lt.s32.totalorder %s8, 5
    %p144 = pnand %p142, %p143
    %p145 = pneg %p144
    // Predicated region
    $region25: #{tpu_custom_call.1} parent=5 // pred_check
      _
    $region26: #{tpu_custom_call.1} parent=5 // pred_check_branch
      %147 = sbr.rel (%p144) target = $region28
    $region27: #{tpu_custom_call.1} parent=5 // pred_region
      %s148 = ssub.s32 %s8, 1
      %s149 = smul.u32 16, %s18
      %p150 = scmp.lt.s32.totalorder %s17, 3
      %s151 = scalar_select %p150, %s17, 3
      %p152 = scmp.lt.s32.totalorder %s149, 15
      %s153 = scalar_select %p152, %s149, 15
      %s154 = smul.addr %s151, 16
      %s155 = sadd.s32 %s153, %s154
      %s156 = smul.addr %s155, 4
      %s157 = scalar_lea.vmem %s0, %s156
      %p158 = pneg %p48
      %p159 = pneg %p45
      %p160 = scmp.lt.s32.totalorder %s17, 3
      %s161 = scalar_select %p160, %s17, 3
      %s162 = smul.addr %s161, 4
      %s163 = smul.addr %s162, 4
      %s164 = scalar_lea.vmem %s1, %s163
      %p165 = pneg %p74
      %p166 = pneg %p71
      %p167 = pneg %p102
      %p168 = pneg %p99
      %s169 = smul.u32 16, %s18
      %p170 = scmp.lt.s32.totalorder %s17, 3
      %s171 = scalar_select %p170, %s17, 3
      %p172 = scmp.lt.s32.totalorder %s169, 15
      %s173 = scalar_select %p172, %s169, 15
      %s174 = smul.addr %s171, 16
      %s175 = sadd.s32 %s173, %s174
      %s176 = smul.addr %s175, 4
      %s177 = scalar_lea.vmem %s2, %s176
      %s178 = smul.u32 16, %s18
      %p179 = scmp.lt.s32.totalorder %s17, 3
      %s180 = scalar_select %p179, %s17, 3
      %p181 = scmp.lt.s32.totalorder %s178, 15
      %s182 = scalar_select %p181, %s178, 15
      %s183 = smul.addr %s180, 16
      %s184 = sadd.s32 %s182, %s183
      %s185 = smul.addr %s184, 4
      %s186 = scalar_lea.vmem %s0, %s185
      %s187 = smul.u32 16, %s18
      %p188 = scmp.lt.s32.totalorder %s17, 3
      %s189 = scalar_select %p188, %s17, 3
      %s190 = smul.addr %s189, 4
      %s191 = smul.addr %s190, 4
      %s192 = scalar_lea.vmem %s1, %s191
      %s193 = smul.u32 16, %s18
      %p194 = scmp.lt.s32.totalorder %s17, 3
      %s195 = scalar_select %p194, %s17, 3
      %p196 = scmp.lt.s32.totalorder %s193, 15
      %s197 = scalar_select %p196, %s193, 15
      %s198 = smul.addr %s195, 16
      %s199 = sadd.s32 %s197, %s198
      %s200 = smul.addr %s199, 4
      %s201 = scalar_lea.vmem %s2, %s200
      %s202 = smul.u32 16, %s18
      %v204 = vld [vmem:[%s186] sm:$0xf]
      %v205 = vld [vmem:[%s186 + $0x4] sm:$0xf]
      %v206 = vld [vmem:[%s186 + $0x8] sm:$0xf]
      %v207 = vld [vmem:[%s186 + $0xc] sm:$0xf]
      %v208 = vld [vmem:[%s186 + $0x10] sm:$0xf]
      %v209 = vld [vmem:[%s186 + $0x14] sm:$0xf]
      %v210 = vld [vmem:[%s186 + $0x18] sm:$0xf]
      %v211 = vld [vmem:[%s186 + $0x1c] sm:$0xf]
      %v212 = vld [vmem:[%s186 + $0x20] sm:$0xf]
      %v213 = vld [vmem:[%s186 + $0x24] sm:$0xf]
      %v214 = vld [vmem:[%s186 + $0x28] sm:$0xf]
      %v215 = vld [vmem:[%s186 + $0x2c] sm:$0xf]
      %v216 = vld [vmem:[%s186 + $0x30] sm:$0xf]
      %v217 = vld [vmem:[%s186 + $0x34] sm:$0xf]
      %v218 = vld [vmem:[%s186 + $0x38] sm:$0xf]
      %v219 = vld [vmem:[%s186 + $0x3c] sm:$0xf]
      %v220 = vld [vmem:[%s192] sm:$0xf]
      %v221 = vld [vmem:[%s192 + $0x4] sm:$0xf]
      %v222 = vld [vmem:[%s192 + $0x8] sm:$0xf]
      %v223 = vld [vmem:[%s192 + $0xc] sm:$0xf]
      %v240 = vunpack.c.l.b16 %v204
      %v241 = vunpack.c.l.b16 %v205
      %v242 = vunpack.c.l.b16 %v206
      %v243 = vunpack.c.l.b16 %v207
      %v244 = vunpack.c.l.b16 %v208
      %v245 = vunpack.c.l.b16 %v209
      %v246 = vunpack.c.l.b16 %v210
      %v247 = vunpack.c.l.b16 %v211
      %v248 = vunpack.c.l.b16 %v212
      %v249 = vunpack.c.l.b16 %v213
      %v250 = vunpack.c.l.b16 %v214
      %v251 = vunpack.c.l.b16 %v215
      %v252 = vunpack.c.l.b16 %v216
      %v253 = vunpack.c.l.b16 %v217
      %v254 = vunpack.c.l.b16 %v218
      %v255 = vunpack.c.l.b16 %v219
      %v256 = vpack.c.b16 %v241, %v240
      %v257 = vpack.c.b16 %v243, %v242
      %v258 = vpack.c.b16 %v245, %v244
      %v259 = vpack.c.b16 %v247, %v246
      %v260 = vpack.c.b16 %v249, %v248
      %v261 = vpack.c.b16 %v251, %v250
      %v262 = vpack.c.b16 %v253, %v252
      %v263 = vpack.c.b16 %v255, %v254
      %v268 = vunpack.c.l.b16 %v220
      %v269 = vunpack.c.l.b16 %v221
      %v270 = vunpack.c.l.b16 %v222
      %v271 = vunpack.c.l.b16 %v223
      %v272 = vpack.c.b16 %v269, %v268
      %v273 = vpack.c.b16 %v271, %v270
      %vm276 = vcmask 261120
      %v278 = vsel %vm276, %v256, 0
      %v281 = vsel %vm276, %v257, 0
      %v284 = vsel %vm276, %v258, 0
      %v287 = vsel %vm276, %v259, 0
      %v290 = vsel %vm276, %v260, 0
      %v293 = vsel %vm276, %v261, 0
      %v296 = vsel %vm276, %v262, 0
      %v299 = vsel %vm276, %v263, 0
      %301 = vmatprep.subr.bf16.mxu0 0
      %302 = vmatpush1.bf16.msra.mxu0 0
      %303 = vmatprep.subr.bf16.mxu0 0
      %304 = vmatpush1.bf16.msra.mxu0 0
      %305 = vmatprep.subr.bf16.mxu0 0
      %306 = vmatpush1.bf16.msra.mxu0 0
      %307 = vmatprep.subr.bf16.mxu0 0
      %308 = vmatpush1.bf16.msra.mxu0 0
      %309 = vmatprep.subr.bf16.mxu0 0
      %310 = vmatpush1.bf16.msra.mxu0 0
      %311 = vmatprep.subr.bf16.mxu0 0
      %312 = vmatpush1.bf16.msra.mxu0 0
      %313 = vmatprep.subr.bf16.mxu0 0
      %314 = vmatpush1.bf16.msra.mxu0 %v273
      %315 = vmatprep.subr.bf16.mxu0 0
      %316 = vmatpush1.bf16.msra.mxu0 %v272
      %317 = vmatprep.subr.bf16.mxu0 0
      %318 = vmatpush2.bf16.msra.mxu0 0
      %319 = vmatprep.subr.bf16.mxu0 0
      %320 = vmatpush2.bf16.msra.mxu0 0
      %321 = vmatprep.subr.bf16.mxu0 0
      %322 = vmatpush2.bf16.msra.mxu0 0
      %323 = vmatprep.subr.bf16.mxu0 0
      %324 = vmatpush2.bf16.msra.mxu0 0
      %325 = vmatprep.subr.bf16.mxu0 0
      %326 = vmatpush2.bf16.msra.mxu0 0
      %327 = vmatprep.subr.bf16.mxu0 0
      %328 = vmatpush2.bf16.msra.mxu0 0
      %329 = vmatprep.subr.bf16.mxu0 0
      %330 = vmatpush2.bf16.msra.mxu0 0
      %331 = vmatprep.subr.bf16.mxu0 0
      %332 = vmatpush2.bf16.msra.mxu0 0
      %333 = vmatprep.mubr.bf16.mxu0 0
      %334 = vmatmul.mubr.bf16.gmra.mxu0 %v278
      %v335 = vpop.f32.mrf.mxu0
      %v336 = vadd.f32 0.0, %v335
      %v337 = vpop.f32.mrf.mxu0
      %v338 = vpop.f32.mrf.mxu0
      %v339 = vadd.f32 0.0, %v338
      %v340 = vpop.f32.mrf.mxu0
      %341 = vmatprep.mubr.bf16.mxu0 0
      %342 = vmatmul.mubr.bf16.gmra.mxu0 %v281
      %v343 = vpop.f32.mrf.mxu0
      %v344 = vadd.f32 0.0, %v343
      %v345 = vpop.f32.mrf.mxu0
      %v346 = vpop.f32.mrf.mxu0
      %v347 = vadd.f32 0.0, %v346
      %v348 = vpop.f32.mrf.mxu0
      %349 = vmatprep.mubr.bf16.mxu0 0
      %350 = vmatmul.mubr.bf16.gmra.mxu0 %v284
      %v351 = vpop.f32.mrf.mxu0
      %v352 = vadd.f32 0.0, %v351
      %v353 = vpop.f32.mrf.mxu0
      %v354 = vpop.f32.mrf.mxu0
      %v355 = vadd.f32 0.0, %v354
      %v356 = vpop.f32.mrf.mxu0
      %357 = vmatprep.mubr.bf16.mxu0 0
      %358 = vmatmul.mubr.bf16.gmra.mxu0 %v287
      %v359 = vpop.f32.mrf.mxu0
      %v360 = vadd.f32 0.0, %v359
      %v361 = vpop.f32.mrf.mxu0
      %v362 = vpop.f32.mrf.mxu0
      %v363 = vadd.f32 0.0, %v362
      %v364 = vpop.f32.mrf.mxu0
      %365 = vmatprep.mubr.bf16.mxu0 0
      %366 = vmatmul.mubr.bf16.gmra.mxu0 %v290
      %v367 = vpop.f32.mrf.mxu0
      %v368 = vadd.f32 0.0, %v367
      %v369 = vpop.f32.mrf.mxu0
      %v370 = vpop.f32.mrf.mxu0
      %v371 = vadd.f32 0.0, %v370
      %v372 = vpop.f32.mrf.mxu0
      %373 = vmatprep.mubr.bf16.mxu0 0
      %374 = vmatmul.mubr.bf16.gmra.mxu0 %v293
      %v375 = vpop.f32.mrf.mxu0
      %v376 = vadd.f32 0.0, %v375
      %v377 = vpop.f32.mrf.mxu0
      %v378 = vpop.f32.mrf.mxu0
      %v379 = vadd.f32 0.0, %v378
      %v380 = vpop.f32.mrf.mxu0
      %381 = vmatprep.mubr.bf16.mxu0 0
      %382 = vmatmul.mubr.bf16.gmra.mxu0 %v296
      %v383 = vpop.f32.mrf.mxu0
      %v384 = vadd.f32 0.0, %v383
      %v385 = vpop.f32.mrf.mxu0
      %v386 = vpop.f32.mrf.mxu0
      %v387 = vadd.f32 0.0, %v386
      %v388 = vpop.f32.mrf.mxu0
      %389 = vmatprep.mubr.bf16.mxu0 0
      %390 = vmatmul.mubr.bf16.gmra.mxu0 %v299
      %v391 = vpop.f32.mrf.mxu0
      %v392 = vadd.f32 0.0, %v391
      %v393 = vpop.f32.mrf.mxu0
      %v394 = vpop.f32.mrf.mxu0
      %v395 = vadd.f32 0.0, %v394
      %v396 = vpop.f32.mrf.mxu0
      %397 = vdwg.mxu0
      %v398 = vpack.c.bf16 %v339, %v336
      %v399 = vpack.c.bf16 %v347, %v344
      %v400 = vpack.c.bf16 %v355, %v352
      %v401 = vpack.c.bf16 %v363, %v360
      %v402 = vpack.c.bf16 %v371, %v368
      %v403 = vpack.c.bf16 %v379, %v376
      %v404 = vpack.c.bf16 %v387, %v384
      %v405 = vpack.c.bf16 %v395, %v392
      %v414 = vunpack.c.l.b16 %v398
      %v415 = vunpack.c.h.b16 %v398
      %v416 = vunpack.c.l.b16 %v399
      %v417 = vunpack.c.h.b16 %v399
      %v418 = vunpack.c.l.b16 %v400
      %v419 = vunpack.c.h.b16 %v400
      %v420 = vunpack.c.l.b16 %v401
      %v421 = vunpack.c.h.b16 %v401
      %v422 = vunpack.c.l.b16 %v402
      %v423 = vunpack.c.h.b16 %v402
      %v424 = vunpack.c.l.b16 %v403
      %v425 = vunpack.c.h.b16 %v403
      %v426 = vunpack.c.l.b16 %v404
      %v427 = vunpack.c.h.b16 %v404
      %v428 = vunpack.c.l.b16 %v405
      %v429 = vunpack.c.h.b16 %v405
      %v430 = vpack.c.b16 %v414, %v414
      %v431 = vpack.c.b16 %v415, %v415
      %v432 = vpack.c.b16 %v416, %v416
      %v433 = vpack.c.b16 %v417, %v417
      %v434 = vpack.c.b16 %v418, %v418
      %v435 = vpack.c.b16 %v419, %v419
      %v436 = vpack.c.b16 %v420, %v420
      %v437 = vpack.c.b16 %v421, %v421
      %v438 = vpack.c.b16 %v422, %v422
      %v439 = vpack.c.b16 %v423, %v423
      %v440 = vpack.c.b16 %v424, %v424
      %v441 = vpack.c.b16 %v425, %v425
      %v442 = vpack.c.b16 %v426, %v426
      %v443 = vpack.c.b16 %v427, %v427
      %v444 = vpack.c.b16 %v428, %v428
      %v445 = vpack.c.b16 %v429, %v429
      %vm462 = vcmask 257024
      %463 = vst.msk [vmem:[%s201] sm:$0xf] %vm462, %v430
      %464 = vst.msk [vmem:[%s201 + $0x4] sm:$0xf] %vm462, %v431
      %465 = vst.msk [vmem:[%s201 + $0x8] sm:$0xf] %vm462, %v432
      %466 = vst.msk [vmem:[%s201 + $0xc] sm:$0xf] %vm462, %v433
      %467 = vst.msk [vmem:[%s201 + $0x10] sm:$0xf] %vm462, %v434
      %468 = vst.msk [vmem:[%s201 + $0x14] sm:$0xf] %vm462, %v435
      %469 = vst.msk [vmem:[%s201 + $0x18] sm:$0xf] %vm462, %v436
      %470 = vst.msk [vmem:[%s201 + $0x1c] sm:$0xf] %vm462, %v437
      %471 = vst.msk [vmem:[%s201 + $0x20] sm:$0xf] %vm462, %v438
      %472 = vst.msk [vmem:[%s201 + $0x24] sm:$0xf] %vm462, %v439
      %473 = vst.msk [vmem:[%s201 + $0x28] sm:$0xf] %vm462, %v440
      %474 = vst.msk [vmem:[%s201 + $0x2c] sm:$0xf] %vm462, %v441
      %475 = vst.msk [vmem:[%s201 + $0x30] sm:$0xf] %vm462, %v442
      %476 = vst.msk [vmem:[%s201 + $0x34] sm:$0xf] %vm462, %v443
      %477 = vst.msk [vmem:[%s201 + $0x38] sm:$0xf] %vm462, %v444
      %478 = vst.msk [vmem:[%s201 + $0x3c] sm:$0xf] %vm462, %v445
      %s479 = smul.u32 16, %s18
      %p480 = scmp.lt.s32.totalorder %s17, 3
      %s481 = scalar_select %p480, %s17, 3
      %p482 = scmp.lt.s32.totalorder %s479, 15
      %s483 = scalar_select %p482, %s479, 15
      %s484 = smul.addr %s481, 16
      %s485 = sadd.s32 %s483, %s484
      %s486 = smul.addr %s485, 4
      %s487 = scalar_lea.vmem %s2, %s486
      // Predicated region
      $region29: #{tpu_custom_call.1} parent=27 // pred_check
        %p488 = pneg %p99
      $region30: #{tpu_custom_call.1} parent=27 // pred_check_branch
        %490 = sbr.rel (%p488) target = $region32
      $region31: #{tpu_custom_call.1} parent=27 // pred_region
        %s491 = smul.u32 16, %s18
      $region32: #{tpu_custom_call.1} parent=27 // pred_fallthru
        _
    $region28: #{tpu_custom_call.1} parent=5 // pred_fallthru
      _
    %p492 = scmp.le.s32.totalorder 2, %s8
    // Predicated region
    $region33: #{tpu_custom_call.1} parent=5 // pred_check
      %p493 = pneg %p492
    $region34: #{tpu_custom_call.1} parent=5 // pred_check_branch
      %495 = sbr.rel (%p493) target = $region36
    $region35: #{tpu_custom_call.1} parent=5 // pred_region
      %s496 = ssub.s32 %s8, 2
      // Predicated region
      $region37: #{tpu_custom_call.1} parent=35 // pred_check
        %p497 = pneg %p105
      $region38: #{tpu_custom_call.1} parent=35 // pred_check_branch
        %499 = sbr.rel (%p497) target = $region40
      $region39: #{tpu_custom_call.1} parent=35 // pred_region
        %s500 = smul.u32 16, %s20
        %p501 = scmp.lt.s32.totalorder %s19, 3
        %s502 = scalar_select %p501, %s19, 3
        %p503 = scmp.lt.s32.totalorder %s500, 15
        %s504 = scalar_select %p503, %s500, 15
        %s505 = smul.addr %s502, 16
        %s506 = sadd.s32 %s504, %s505
        %s507 = smul.addr %s506, 4
        %s508 = scalar_lea.vmem %s2, %s507
      $region40: #{tpu_custom_call.1} parent=35 // pred_fallthru
        _
    $region36: #{tpu_custom_call.1} parent=5 // pred_fallthru
      _
  $region6: #{tpu_custom_call.1} parent=0 // loop_footer
    %s12 = sadd.s32 1, %s8
  $region7: #{tpu_custom_call.1} parent=0 // loop_footer_branch
    %7 = sbr.rel target = $region3
  $region8: #{tpu_custom_call.1} parent=0 // loop_exit
    _

</llo_original>
